<compile_context>
chip_gen: v7x
topology: tpu7x:2x2x1
jax: 0.10.0
libtpu: 0.0.40
codegen_flags: <defaults>
</compile_context>

<pallas_src>
import functools

import jax
import jax.numpy as jnp
from jax.experimental import pallas as pl
from jax.experimental.pallas import tpu as pltpu


# --------------------------------------------------------------------------- #
# Fused single-pass kernel: pool + FC1 + ReLU + FC2 + sigmoid + re-weight.    #
# --------------------------------------------------------------------------- #
def _se_fused_kernel(x_ref, w1_ref, w2_ref, o_ref):
    # x_ref, o_ref: (Bt, C, HW)  -- C on sublanes, HW on lanes
    # w1_ref: (MID, C), w2_ref: (C, MID)  -- PyTorch (out, in) layout, bias=False
    bt = x_ref.shape[0]
    hw = x_ref.shape[2]
    inv_hw = 1.0 / hw

    # Squeeze: per-image global average pool, accumulated in f32 straight from the
    # ref (no long-lived f32 copy of the whole tile).  Stack columns into (C, Bt).
    cols = [
        jnp.sum(x_ref[b], axis=1, keepdims=True, dtype=jnp.float32) * inv_hw
        for b in range(bt)
    ]
    pooled = cols[0] if bt == 1 else jnp.concatenate(cols, axis=1)       # (C, Bt)

    # Excitation: FC -> ReLU -> FC -> sigmoid, batched over the Bt pooled columns.
    hidden = jnp.dot(w1_ref[...], pooled, preferred_element_type=jnp.float32)
    hidden = jnp.maximum(hidden, 0.0)                                    # (MID, Bt)
    logits = jnp.dot(w2_ref[...], hidden, preferred_element_type=jnp.float32)
    scale = 1.0 / (1.0 + jnp.exp(-logits))                               # (C, Bt)

    # Re-weight: per-channel scale, lane-broadcast against each (C, HW) sub-tile.
    # Re-read from the VMEM-resident ref per image so live ranges stay bounded.
    for b in range(bt):
        s = scale[:, b:b + 1]                                            # (C, 1)
        if x_ref.dtype != jnp.float32:
            s = s.astype(x_ref.dtype)                                    # bf16 math on v6e/v7x
        o_ref[b] = (x_ref[b] * s).astype(o_ref.dtype)


# --------------------------------------------------------------------------- #
# Two-pass spatially tiled fallback (per-image tile too big for the VMEM budget)
# --------------------------------------------------------------------------- #
def _se_pool_excite_kernel(x_ref, w1_ref, w2_ref, scale_ref, *, hw_total):
    # Pass 1: accumulate pooled sums over HW tiles; at the last tile run the tiny
    # excitation MLP and overwrite the accumulator with the sigmoid scale.
    # x_ref: (1, C, thw); scale_ref: (1, C, 1) f32, resident across the HW axis.
    k = pl.program_id(1)

    @pl.when(k == 0)
    def _():
        scale_ref[...] = jnp.zeros_like(scale_ref)

    scale_ref[...] += jnp.sum(x_ref[...], axis=2, keepdims=True, dtype=jnp.float32)

    @pl.when(k == pl.num_programs(1) - 1)
    def _():
        pooled = scale_ref[0] * (1.0 / hw_total)                          # (C, 1)
        hidden = jnp.dot(w1_ref[...], pooled, preferred_element_type=jnp.float32)
        hidden = jnp.maximum(hidden, 0.0)                                 # (MID, 1)
        logits = jnp.dot(w2_ref[...], hidden, preferred_element_type=jnp.float32)
        scale_ref[0] = 1.0 / (1.0 + jnp.exp(-logits))                     # (C, 1)


def _se_apply_kernel(x_ref, scale_ref, o_ref):
    # Pass 2: out = x * scale, spatially tiled, lane-dense stores.
    s = scale_ref[0]                                                      # (C, 1)
    if x_ref.dtype != jnp.float32:
        s = s.astype(x_ref.dtype)
    o_ref[0] = (x_ref[0] * s).astype(o_ref.dtype)


# --------------------------------------------------------------------------- #
# Tiling helpers
# --------------------------------------------------------------------------- #
def _pick_batch_tile(n, per_image_bytes, target_bytes, max_unroll=16):
    """Images per grid step: fill ~target_bytes, keep >=2 grid steps when possible."""
    bt = max(1, min(n, target_bytes // max(per_image_bytes, 1), max_unroll))
    if n >= 2:
        bt = max(1, min(bt, n // 2))      # leave work for both v7x TensorCores
    while n % bt != 0:
        bt -= 1
    return bt


def _pick_spatial_tile(hw, c, itemsize, target_bytes):
    """Largest multiple-of-128 divisor of HW whose (C, thw) tile fits target_bytes."""
    best = None
    t = 128
    while t <= hw:
        if hw % t == 0 and c * t * itemsize <= target_bytes:
            best = t
        t += 128
    return best if best is not None else hw


# --------------------------------------------------------------------------- #
# Wrapper
# --------------------------------------------------------------------------- #
def se_attention_forward(x_nchw, w1, w2, *, max_block_bytes=4 << 20):
    """SEAttention.forward.  x_nchw: (N, C, H, W); w1: (C//r, C); w2: (C, C//r)."""
    n, c, h, w = x_nchw.shape
    mid = w1.shape[0]
    hw = h * w
    x = x_nchw.reshape(n, c, hw)                 # free view for contiguous NCHW
    itemsize = x.dtype.itemsize
    per_image_bytes = c * hw * itemsize
    weight_bytes = w1.size * w1.dtype.itemsize + w2.size * w2.dtype.itemsize

    if per_image_bytes <= max_block_bytes:
        # ----------------------- fused single-pass path ------------------- #
        bt = _pick_batch_tile(n, per_image_bytes, max_block_bytes)
        block_bytes = bt * per_image_bytes
        vmem_limit = int(min(max(5 * block_bytes + 4 * weight_bytes + (2 << 20),
                                 32 << 20), 64 << 20))
        out = pl.pallas_call(
            _se_fused_kernel,
            out_shape=jax.ShapeDtypeStruct((n, c, hw), x.dtype),
            grid_spec=pltpu.PrefetchScalarGridSpec(
                num_scalar_prefetch=0,
                grid=(n // bt,),
                in_specs=[
                    pl.BlockSpec((bt, c, hw), lambda i: (i, 0, 0)),
                    pl.BlockSpec((mid, c), lambda i: (0, 0)),   # weights resident
                    pl.BlockSpec((c, mid), lambda i: (0, 0)),
                ],
                out_specs=pl.BlockSpec((bt, c, hw), lambda i: (i, 0, 0)),
            ),
            compiler_params=pltpu.CompilerParams(
                dimension_semantics=("parallel",),
                vmem_limit_bytes=vmem_limit),
            cost_estimate=pl.CostEstimate(
                flops=int(2 * n * c * hw + 4 * n * c * mid),
                transcendentals=int(n * c),
                bytes_accessed=int(2 * n * c * hw * itemsize + weight_bytes)),
        )(x, w1, w2)
        return out.reshape(n, c, h, w)

    # --------------------- two-pass spatially tiled path ------------------ #
    thw = _pick_spatial_tile(hw, c, itemsize, max_block_bytes)
    nk = hw // thw
    tile_bytes = c * thw * itemsize
    vmem_limit = int(min(max(6 * tile_bytes + 4 * weight_bytes + (2 << 20),
                             32 << 20), 64 << 20))

    # Pass 1: pooled sums over HW tiles -> per-channel sigmoid scale (f32, (N,C,1)).
    scale = pl.pallas_call(
        functools.partial(_se_pool_excite_kernel, hw_total=float(hw)),
        out_shape=jax.ShapeDtypeStruct((n, c, 1), jnp.float32),
        grid_spec=pltpu.PrefetchScalarGridSpec(
            num_scalar_prefetch=0,
            grid=(n, nk),
            in_specs=[
                pl.BlockSpec((1, c, thw), lambda i, k: (i, 0, k)),
                pl.BlockSpec((mid, c), lambda i, k: (0, 0)),
                pl.BlockSpec((c, mid), lambda i, k: (0, 0)),
            ],
            out_specs=pl.BlockSpec((1, c, 1), lambda i, k: (i, 0, 0)),
        ),
        compiler_params=pltpu.CompilerParams(
            dimension_semantics=("parallel", "arbitrary"),
            vmem_limit_bytes=vmem_limit),
        cost_estimate=pl.CostEstimate(
            flops=int(n * c * hw + 4 * n * c * mid),
            transcendentals=int(n * c),
            bytes_accessed=int(n * c * hw * itemsize + weight_bytes)),
    )(x, w1, w2)

    # Pass 2: re-read x tiles and apply the per-channel scale.
    out = pl.pallas_call(
        _se_apply_kernel,
        out_shape=jax.ShapeDtypeStruct((n, c, hw), x.dtype),
        grid_spec=pltpu.PrefetchScalarGridSpec(
            num_scalar_prefetch=0,
            grid=(n, nk),
            in_specs=[
                pl.BlockSpec((1, c, thw), lambda i, k: (i, 0, k)),
                pl.BlockSpec((1, c, 1), lambda i, k: (i, 0, 0)),
            ],
            out_specs=pl.BlockSpec((1, c, thw), lambda i, k: (i, 0, k)),
        ),
        compiler_params=pltpu.CompilerParams(
            dimension_semantics=("parallel", "parallel"),
            vmem_limit_bytes=vmem_limit),
        cost_estimate=pl.CostEstimate(
            flops=int(n * c * hw),
            transcendentals=0,
            bytes_accessed=int(2 * n * c * hw * itemsize)),
    )(x, scale)
    return out.reshape(n, c, h, w)


def se_attention_reference(x, w1, w2):
    """Pure-JAX reference matching the PyTorch module (forward only)."""
    y = jnp.mean(x, axis=(2, 3))                 # AdaptiveAvgPool2d(1) -> (N, C)
    y = jnp.maximum(y @ w1.T, 0.0)               # Linear(C, C//r, bias=False) + ReLU
    y = jax.nn.sigmoid(y @ w2.T)                 # Linear(C//r, C, bias=False) + Sigmoid
    return x * y[:, :, None, None]               # x * y.expand_as(x)


if __name__ == "__main__":
    key = jax.random.PRNGKey(0)
    k_x, k_w1, k_w2 = jax.random.split(key, 3)

    # channel must be >= reduction (default 16) for a non-empty bottleneck.
    N, C, H, W = 4, 64, 16, 16
    reduction = 16
    MID = C // reduction

    x = jax.random.normal(k_x, (N, C, H, W), dtype=jnp.float32)
    w1 = jax.random.normal(k_w1, (MID, C), dtype=jnp.float32) * (1.0 / jnp.sqrt(C))
    w2 = jax.random.normal(k_w2, (C, MID), dtype=jnp.float32) * (1.0 / jnp.sqrt(MID))

    ref = se_attention_reference(x, w1, w2)

    # Fast path: fused kernel, multiple images per grid step.
    out = jax.block_until_ready(se_attention_forward(x, w1, w2))
    assert out.shape == (N, C, H, W), out.shape
    assert jnp.allclose(out, ref, rtol=1e-4, atol=1e-4), float(jnp.max(jnp.abs(out - ref)))

    # Force the two-pass spatially tiled fallback (tiny VMEM budget) and check it too.
    out2 = jax.block_until_ready(
        se_attention_forward(x, w1, w2, max_block_bytes=32 * 1024))
    assert jnp.allclose(out2, ref, rtol=1e-4, atol=1e-4), float(jnp.max(jnp.abs(out2 - ref)))

    print("KERNEL_OK")
</pallas_src>

<mosaic_0001>
module attributes {stable_mosaic.version = 11 : i64} {
  func.func @_se_fused_kernel(%arg0: i32, %arg1: memref<2x64x256xf32, #tpu.memory_space<vmem>>, %arg2: memref<4x64xf32, #tpu.memory_space<vmem>>, %arg3: memref<64x4xf32, #tpu.memory_space<vmem>>, %arg4: memref<2x64x256xf32, #tpu.memory_space<vmem>>) attributes {dimension_semantics = [#tpu.dimension_semantics<parallel>], iteration_bounds = array<i64: 2>, scalar_prefetch = 0 : i64, scratch_operands = 0 : i64, tpu.core_type = #tpu.core_type<tc>, window_params = [{transform_indices = @transform_0, window_bounds = array<i64: 2, 64, 256>}, {pipeline_mode = #tpu.pipeline_mode<synchronous>, transform_indices = @transform_1, window_bounds = array<i64: 4, 64>}, {pipeline_mode = #tpu.pipeline_mode<synchronous>, transform_indices = @transform_2, window_bounds = array<i64: 64, 4>}, {transform_indices = @transform_3, window_bounds = array<i64: 2, 64, 256>}]} {
    %c0 = arith.constant 0 : index
    %c0_0 = arith.constant 0 : index
    %c0_1 = arith.constant 0 : index
    %0 = vector.load %arg1[%c0, %c0_0, %c0_1] : memref<2x64x256xf32, #tpu.memory_space<vmem>>, vector<1x64x256xf32>
    %1 = vector.shape_cast %0 : vector<1x64x256xf32> to vector<64x256xf32>
    %cst = arith.constant dense<0.000000e+00> : vector<64xf32>
    %2 = vector.multi_reduction <add>, %1, %cst [1] : vector<64x256xf32> to vector<64xf32>
    %3 = vector.shape_cast %2 : vector<64xf32> to vector<64x1xf32>
    %cst_2 = arith.constant 3.906250e-03 : f32
    %4 = vector.broadcast %cst_2 : f32 to vector<64x1xf32>
    %5 = arith.mulf %3, %4 : vector<64x1xf32>
    %c1 = arith.constant 1 : index
    %c0_3 = arith.constant 0 : index
    %c0_4 = arith.constant 0 : index
    %6 = vector.load %arg1[%c1, %c0_3, %c0_4] : memref<2x64x256xf32, #tpu.memory_space<vmem>>, vector<1x64x256xf32>
    %7 = vector.shape_cast %6 : vector<1x64x256xf32> to vector<64x256xf32>
    %cst_5 = arith.constant dense<0.000000e+00> : vector<64xf32>
    %8 = vector.multi_reduction <add>, %7, %cst_5 [1] : vector<64x256xf32> to vector<64xf32>
    %9 = vector.shape_cast %8 : vector<64xf32> to vector<64x1xf32>
    %cst_6 = arith.constant 3.906250e-03 : f32
    %10 = vector.broadcast %cst_6 : f32 to vector<64x1xf32>
    %11 = arith.mulf %9, %10 : vector<64x1xf32>
    %12 = tpu.concatenate %5, %11 in 1 : vector<64x1xf32>, vector<64x1xf32> -> vector<64x2xf32>
    %c0_7 = arith.constant 0 : index
    %c0_8 = arith.constant 0 : index
    %13 = vector.load %arg2[%c0_7, %c0_8] : memref<4x64xf32, #tpu.memory_space<vmem>>, vector<4x64xf32>
    %cst_9 = arith.constant dense<0.000000e+00> : vector<4x2xf32>
    %14 = tpu.matmul %13, %12, %cst_9 {dimension_numbers = #tpu.dot_dimension_numbers<[1], [0], [0], [1], [0, 0, 1, 1], [], []>} : vector<4x64xf32>, vector<64x2xf32>, vector<4x2xf32> -> vector<4x2xf32>
    %cst_10 = arith.constant 0.000000e+00 : f32
    %15 = vector.broadcast %cst_10 : f32 to vector<4x2xf32>
    %16 = arith.maximumf %14, %15 : vector<4x2xf32>
    %c0_11 = arith.constant 0 : index
    %c0_12 = arith.constant 0 : index
    %17 = vector.load %arg3[%c0_11, %c0_12] : memref<64x4xf32, #tpu.memory_space<vmem>>, vector<64x4xf32>
    %cst_13 = arith.constant dense<0.000000e+00> : vector<64x2xf32>
    %18 = tpu.matmul %17, %16, %cst_13 {dimension_numbers = #tpu.dot_dimension_numbers<[1], [0], [0], [1], [0, 0, 1, 1], [], []>} : vector<64x4xf32>, vector<4x2xf32>, vector<64x2xf32> -> vector<64x2xf32>
    %cst_14 = arith.constant 0.000000e+00 : f32
    %19 = vector.broadcast %cst_14 : f32 to vector<64x2xf32>
    %20 = arith.subf %19, %18 : vector<64x2xf32>
    %21 = math.exp %20 : vector<64x2xf32>
    %cst_15 = arith.constant 1.000000e+00 : f32
    %22 = vector.broadcast %cst_15 : f32 to vector<64x2xf32>
    %23 = arith.addf %22, %21 : vector<64x2xf32>
    %cst_16 = arith.constant 1.000000e+00 : f32
    %24 = vector.broadcast %cst_16 : f32 to vector<64x2xf32>
    %25 = arith.divf %24, %23 : vector<64x2xf32>
    %26 = vector.extract_strided_slice %25 {offsets = [0, 0], sizes = [64, 1], strides = [1, 1]} : vector<64x2xf32> to vector<64x1xf32>
    %c0_17 = arith.constant 0 : index
    %c0_18 = arith.constant 0 : index
    %c0_19 = arith.constant 0 : index
    %27 = vector.load %arg1[%c0_17, %c0_18, %c0_19] : memref<2x64x256xf32, #tpu.memory_space<vmem>>, vector<1x64x256xf32>
    %28 = vector.shape_cast %27 : vector<1x64x256xf32> to vector<64x256xf32>
    %29 = vector.broadcast %26 : vector<64x1xf32> to vector<64x256xf32>
    %30 = arith.mulf %28, %29 : vector<64x256xf32>
    %c0_20 = arith.constant 0 : index
    %c0_21 = arith.constant 0 : index
    %c0_22 = arith.constant 0 : index
    %31 = vector.load %arg4[%c0_20, %c0_21, %c0_22] : memref<2x64x256xf32, #tpu.memory_space<vmem>>, vector<1x64x256xf32>
    %32 = vector.shape_cast %31 : vector<1x64x256xf32> to vector<64x256xf32>
    %33 = vector.shape_cast %30 : vector<64x256xf32> to vector<1x64x256xf32>
    tpu.vector_store %arg4[%c0_20, %c0_21, %c0_22], %33 {strides = array<i32>} : memref<2x64x256xf32, #tpu.memory_space<vmem>>, vector<1x64x256xf32>,
    %34 = vector.extract_strided_slice %25 {offsets = [0, 1], sizes = [64, 1], strides = [1, 1]} : vector<64x2xf32> to vector<64x1xf32>
    %c1_23 = arith.constant 1 : index
    %c0_24 = arith.constant 0 : index
    %c0_25 = arith.constant 0 : index
    %35 = vector.load %arg1[%c1_23, %c0_24, %c0_25] : memref<2x64x256xf32, #tpu.memory_space<vmem>>, vector<1x64x256xf32>
    %36 = vector.shape_cast %35 : vector<1x64x256xf32> to vector<64x256xf32>
    %37 = vector.broadcast %34 : vector<64x1xf32> to vector<64x256xf32>
    %38 = arith.mulf %36, %37 : vector<64x256xf32>
    %c1_26 = arith.constant 1 : index
    %c0_27 = arith.constant 0 : index
    %c0_28 = arith.constant 0 : index
    %39 = vector.load %arg4[%c1_26, %c0_27, %c0_28] : memref<2x64x256xf32, #tpu.memory_space<vmem>>, vector<1x64x256xf32>
    %40 = vector.shape_cast %39 : vector<1x64x256xf32> to vector<64x256xf32>
    %41 = vector.shape_cast %38 : vector<64x256xf32> to vector<1x64x256xf32>
    tpu.vector_store %arg4[%c1_26, %c0_27, %c0_28], %41 {strides = array<i32>} : memref<2x64x256xf32, #tpu.memory_space<vmem>>, vector<1x64x256xf32>,
    return
  }
  func.func @transform_0(%arg0: i32) -> (i32, i32, i32) {
    %c0_i32 = arith.constant 0 : i32
    %c0_i32_0 = arith.constant 0 : i32
    %c0_i32_1 = arith.constant 0 : i32
    return %arg0, %c0_i32, %c0_i32_0 : i32, i32, i32
  }
  func.func @transform_1(%arg0: i32) -> (i32, i32) {
    %c0_i32 = arith.constant 0 : i32
    %c0_i32_0 = arith.constant 0 : i32
    %c0_i32_1 = arith.constant 0 : i32
    return %c0_i32, %c0_i32_0 : i32, i32
  }
  func.func @transform_2(%arg0: i32) -> (i32, i32) {
    %c0_i32 = arith.constant 0 : i32
    %c0_i32_0 = arith.constant 0 : i32
    %c0_i32_1 = arith.constant 0 : i32
    return %c0_i32, %c0_i32_0 : i32, i32
  }
  func.func @transform_3(%arg0: i32) -> (i32, i32, i32) {
    %c0_i32 = arith.constant 0 : i32
    %c0_i32_0 = arith.constant 0 : i32
    %c0_i32_1 = arith.constant 0 : i32
    return %arg0, %c0_i32, %c0_i32_0 : i32, i32, i32
  }
}

</mosaic_0001>

<llo_original>
// kernel: tpu_custom_call.1
$region0: #{tpu_custom_call.1}
  #allocation0 [shape = 'u32[]', space=smem, size = 0x4, offset = 0x4, fixed_abs, tag = 'smem constant byte address 0x4 - core index']
  #allocation1 [shape = 'u32[144,128]{1,0:T(1,128)}', space=vmem, size = 0x12000, scoped, tag = 'internal scratch']
  %s0 = inlined_call_operand.hbm [shape: f32[4,64,256], index: 0, kind: input, shape index: {}]
  %s1 = inlined_call_operand.vmem [shape: f32[4,64], index: 1, kind: input, shape index: {}]
  %s2 = inlined_call_operand.vmem [shape: f32[64,4], index: 2, kind: input, shape index: {}]
  %s3 = inlined_call_operand.hbm [shape: f32[4,64,256], index: 3, kind: output, shape index: {}]
  %s4 = sld [smem:[#allocation0]]
  $region49: #{tpu_custom_call.1} parent=0
    _
  %s6 = ssub.s32 1, %s4
  %s7 = scalar_select 0, %s6, %s4
  $region1: #{tpu_custom_call.1} parent=0
    #allocation2 [shape = 'u8[262144]{0}', space=vmem, size = 0x40000, scoped, tag = 'input window, operand 0']
    #allocation3 [shape = 's32[2]{0}', space=sflag, size = 0x8, scoped, tag = 'scoped memory for tpu_custom_call.1']
    #allocation4 [shape = 's32[2]{0}', space=sflag, size = 0x8, scoped, tag = 'scoped memory for tpu_custom_call.1']
    #allocation5 [shape = 'u8[262144]{0}', space=vmem, size = 0x40000, scoped, tag = 'output window, operand 0']
    %8 = vsyncpa [#allocation3], 0
    %s9 = scalar_lea.sflag [#allocation3], 1
    %10 = vsyncpa %s9, 0
    %11 = vsyncpa [#allocation4], 0
    %s12 = scalar_lea.sflag [#allocation4], 1
    %13 = vsyncpa %s12, 0
    loop: start=0, step=1, limit=4
    $region2: #{tpu_custom_call.1} parent=1 // loop_pre_header
      _
    $region3: #{tpu_custom_call.1} parent=1 // loop_header
      %s15 = sphi 0, %s19
      %p16 = scmp.ge.s32.totalorder %s15, 4
      %s25 = sphi 0, %s27
      %s28 = sphi 0, %s25
      %s29 = sphi 0, %s28
      %s45 = sphi 0, %s29
      %s49 = sphi 0, %s49
      %s51 = sphi 0, %s49
      %s52 = sphi 0, %s51
      %s66 = sphi 0, %s52
      %s70 = sphi 0, %s70
      %s72 = sphi 0, %s70
      %s73 = sphi 0, %s72
      %s87 = sphi 0, %s73
      %s93 = sphi 0, %s95
      %s96 = sphi 0, %s93
      %s97 = sphi 0, %s96
      %s113 = sphi 0, %s97
    $region4: #{tpu_custom_call.1} parent=1 // loop_header_branch
      %18 = sbr.rel (%p16) target = $region8
    $region5: #{tpu_custom_call.1} parent=1 // loop_body
      %s20 = ssub.s32 %s15, 1
      %s21 = ssub.s32 %s15, 2
      %s22 = sadd.s32 %s15, 1
      %s23 = ssub.s32 %s15, %s22
      %p24 = scmp.eq.s32.totalorder %s23, 0
      %s26 = sadd.s32 %s25, 1
      %s27 = scalar_select %p24, %s25, %s26
      %p30 = pneg %p24
      %p31 = scmp.eq.s32.totalorder %s15, 1
      %p32 = por %p30, %p31
      %p33 = scmp.ne.s32.totalorder %s25, %s28
      %p34 = scmp.eq.s32.totalorder %s15, 0
      %p35 = por %p33, %p34
      %p36 = scmp.ne.s32.totalorder %s25, %s28
      %p37 = scmp.eq.s32.totalorder %s20, 1
      %p38 = por %p36, %p37
      %p39 = scmp.ne.s32.totalorder %s28, %s29
      %p40 = scmp.eq.s32.totalorder %s20, 0
      %p41 = por %p39, %p40
      %p42 = scmp.ne.s32.totalorder %s28, %s29
      %p43 = scmp.eq.s32.totalorder %s21, 1
      %p44 = por %p42, %p43
      %p46 = scmp.ne.s32.totalorder %s29, %s45
      %p47 = scmp.eq.s32.totalorder %s21, 0
      %p48 = por %p46, %p47
      %s50 = sadd.s32 %s49, 1
      %p53 = scmp.eq.s32.totalorder %s15, 1
      %p54 = scmp.ne.s32.totalorder %s49, %s51
      %p55 = scmp.eq.s32.totalorder %s15, 0
      %p56 = por %p54, %p55
      %p57 = scmp.ne.s32.totalorder %s49, %s51
      %p58 = scmp.eq.s32.totalorder %s20, 1
      %p59 = por %p57, %p58
      %p60 = scmp.ne.s32.totalorder %s51, %s52
      %p61 = scmp.eq.s32.totalorder %s20, 0
      %p62 = por %p60, %p61
      %p63 = scmp.ne.s32.totalorder %s51, %s52
      %p64 = scmp.eq.s32.totalorder %s21, 1
      %p65 = por %p63, %p64
      %p67 = scmp.ne.s32.totalorder %s52, %s66
      %p68 = scmp.eq.s32.totalorder %s21, 0
      %p69 = por %p67, %p68
      %s71 = sadd.s32 %s70, 1
      %p74 = scmp.eq.s32.totalorder %s15, 1
      %p75 = scmp.ne.s32.totalorder %s70, %s72
      %p76 = scmp.eq.s32.totalorder %s15, 0
      %p77 = por %p75, %p76
      %p78 = scmp.ne.s32.totalorder %s70, %s72
      %p79 = scmp.eq.s32.totalorder %s20, 1
      %p80 = por %p78, %p79
      %p81 = scmp.ne.s32.totalorder %s72, %s73
      %p82 = scmp.eq.s32.totalorder %s20, 0
      %p83 = por %p81, %p82
      %p84 = scmp.ne.s32.totalorder %s72, %s73
      %p85 = scmp.eq.s32.totalorder %s21, 1
      %p86 = por %p84, %p85
      %p88 = scmp.ne.s32.totalorder %s73, %s87
      %p89 = scmp.eq.s32.totalorder %s21, 0
      %p90 = por %p88, %p89
      %s91 = ssub.s32 %s15, %s22
      %p92 = scmp.eq.s32.totalorder %s91, 0
      %s94 = sadd.s32 %s93, 1
      %s95 = scalar_select %p92, %s93, %s94
      %p98 = pneg %p92
      %p99 = scmp.eq.s32.totalorder %s15, 1
      %p100 = por %p98, %p99
      %p101 = scmp.ne.s32.totalorder %s93, %s96
      %p102 = scmp.eq.s32.totalorder %s15, 0
      %p103 = por %p101, %p102
      %p104 = scmp.ne.s32.totalorder %s93, %s96
      %p105 = scmp.eq.s32.totalorder %s20, 1
      %p106 = por %p104, %p105
      %p107 = scmp.ne.s32.totalorder %s96, %s97
      %p108 = scmp.eq.s32.totalorder %s20, 0
      %p109 = por %p107, %p108
      %p110 = scmp.ne.s32.totalorder %s96, %s97
      %p111 = scmp.eq.s32.totalorder %s21, 1
      %p112 = por %p110, %p111
      %p114 = scmp.ne.s32.totalorder %s97, %s113
      %p115 = scmp.eq.s32.totalorder %s21, 0
      %p116 = por %p114, %p115
      %p117 = scmp.le.s32.totalorder 1, %s15
      %p118 = scmp.lt.s32.totalorder %s15, 3
      %p119 = pnand %p117, %p118
      %p120 = pneg %p119
      // Predicated region
      $region9: #{tpu_custom_call.1} parent=5 // pred_check
        _
      $region10: #{tpu_custom_call.1} parent=5 // pred_check_branch
        %122 = sbr.rel (%p119) target = $region12
      $region11: #{tpu_custom_call.1} parent=5 // pred_region
        %s123 = ssub.s32 %s15, 1
        // Predicated region
        $region13: #{tpu_custom_call.1} parent=11 // pred_check
          %p124 = pneg %p62
        $region14: #{tpu_custom_call.1} parent=11 // pred_check_branch
          %126 = sbr.rel (%p124) target = $region16
        $region15: #{tpu_custom_call.1} parent=11 // pred_region
          _
        $region16: #{tpu_custom_call.1} parent=11 // pred_fallthru
          _
        // Predicated region
        $region17: #{tpu_custom_call.1} parent=11 // pred_check
          %p127 = pneg %p83
        $region18: #{tpu_custom_call.1} parent=11 // pred_check_branch
          %129 = sbr.rel (%p127) target = $region20
        $region19: #{tpu_custom_call.1} parent=11 // pred_region
          _
        $region20: #{tpu_custom_call.1} parent=11 // pred_fallthru
          _
      $region12: #{tpu_custom_call.1} parent=5 // pred_fallthru
        _
      %p130 = scmp.lt.s32.totalorder %s15, 2
      // Predicated region
      $region21: #{tpu_custom_call.1} parent=5 // pred_check
        %p131 = pneg %p130
      $region22: #{tpu_custom_call.1} parent=5 // pred_check_branch
        %133 = sbr.rel (%p131) target = $region24
      $region23: #{tpu_custom_call.1} parent=5 // pred_region
        // Predicated region
        $region25: #{tpu_custom_call.1} parent=23 // pred_check
          %p134 = pneg %p35
        $region26: #{tpu_custom_call.1} parent=23 // pred_check_branch
          %136 = sbr.rel (%p134) target = $region28
        $region27: #{tpu_custom_call.1} parent=23 // pred_region
          %s137 = sand.u32 %s25, 1
          %s138 = scalar_lea.sflag [#allocation3], %s137
          %s139 = sand.u32 %s25, 1
          %s140 = smul.addr %s139, 256
          %s141 = scalar_lea.vmem [#allocation2], %s140
          %s142 = smul.u32 2, %s15
          %s144 = ssub.s32 4096, 4096
          %145 = vsyncadd %s138, %s144
          %s146 = smul.addr %s142, 16
          %s147 = smul.addr %s146, 128
          %s148 = scalar_lea.hbm %s0, %s147
          %s149 = sshll.u32 %s141, 4
          %s150 = int_to_ptr.vmem [resolvable:$true] %s149
          %155 = dma.hbm_to_vmem [thread:$0]  %s148, 4096, %s150, %s138, 256, 256, 16
        $region28: #{tpu_custom_call.1} parent=23 // pred_fallthru
          _
      $region24: #{tpu_custom_call.1} parent=5 // pred_fallthru
        _
      %p156 = scmp.le.s32.totalorder 1, %s15
      %p157 = scmp.lt.s32.totalorder %s15, 3
      %p158 = pnand %p156, %p157
      %p159 = pneg %p158
      // Predicated region
      $region29: #{tpu_custom_call.1} parent=5 // pred_check
        _
      $region30: #{tpu_custom_call.1} parent=5 // pred_check_branch
        %161 = sbr.rel (%p158) target = $region32
      $region31: #{tpu_custom_call.1} parent=5 // pred_region
        %s162 = ssub.s32 %s15, 1
        %s163 = sand.u32 %s28, 1
        %s164 = scalar_lea.sflag [#allocation3], %s163
        %s165 = sand.u32 %s28, 1
        %s166 = smul.addr %s165, 256
        %s167 = scalar_lea.vmem [#allocation2], %s166
        // Predicated region
        $region33: #{tpu_custom_call.1} parent=31 // pred_check
          %p168 = pneg %p41
        $region34: #{tpu_custom_call.1} parent=31 // pred_check_branch
          %170 = sbr.rel (%p168) target = $region36
        $region35: #{tpu_custom_call.1} parent=31 // pred_region
          %171 = dma.done %s164, 4096
        $region36: #{tpu_custom_call.1} parent=31 // pred_fallthru
          _
        %s172 = sand.u32 %s28, 1
        %s173 = scalar_lea.sflag [#allocation3], %s172
        %s174 = sand.u32 %s28, 1
        %s175 = smul.addr %s174, 256
        %s176 = scalar_lea.vmem [#allocation2], %s175
        %p177 = pneg %p41
        %p178 = pneg %p38
        %p179 = pneg %p62
        %p180 = pneg %p59
        %p181 = pneg %p83
        %p182 = pneg %p80
        %p183 = pneg %p109
        %p184 = pneg %p106
        %s185 = sand.u32 %s96, 1
        %s186 = scalar_lea.sflag [#allocation4], %s185
        %s187 = sand.u32 %s96, 1
        %s188 = smul.addr %s187, 256
        %s189 = scalar_lea.vmem [#allocation5], %s188
        %s190 = smul.u32 2, %s20
        %s191 = smul.u32 2, %s20
        %v192 = vld [vmem:[%s167] sm:$0xff]
        %v193 = vld [vmem:[%s167 + $0x8] sm:$0xff]
        %v194 = vld [vmem:[%s167 + $0x10] sm:$0xff]
        %v195 = vld [vmem:[%s167 + $0x18] sm:$0xff]
        %v196 = vld [vmem:[%s167 + $0x20] sm:$0xff]
        %v197 = vld [vmem:[%s167 + $0x28] sm:$0xff]
        %v198 = vld [vmem:[%s167 + $0x30] sm:$0xff]
        %v199 = vld [vmem:[%s167 + $0x38] sm:$0xff]
        %v200 = vld [vmem:[%s167 + $0x40] sm:$0xff]
        %v201 = vld [vmem:[%s167 + $0x48] sm:$0xff]
        %v202 = vld [vmem:[%s167 + $0x50] sm:$0xff]
        %v203 = vld [vmem:[%s167 + $0x58] sm:$0xff]
        %v204 = vld [vmem:[%s167 + $0x60] sm:$0xff]
        %v205 = vld [vmem:[%s167 + $0x68] sm:$0xff]
        %v206 = vld [vmem:[%s167 + $0x70] sm:$0xff]
        %v207 = vld [vmem:[%s167 + $0x78] sm:$0xff]
        %v208 = vadd.f32 %v192, %v193
        %209 = vadd.xlane.f32.xlu0 %v208
        %v210 = vpop.xlane.xlu0 %209
        %v211 = vadd.f32 %v194, %v195
        %212 = vadd.xlane.f32.xlu0 %v211
        %v213 = vpop.xlane.xlu0 %212
        %v214 = vadd.f32 %v196, %v197
        %215 = vadd.xlane.f32.xlu0 %v214
        %v216 = vpop.xlane.xlu0 %215
        %v217 = vadd.f32 %v198, %v199
        %218 = vadd.xlane.f32.xlu0 %v217
        %v219 = vpop.xlane.xlu0 %218
        %v220 = vadd.f32 %v200, %v201
        %221 = vadd.xlane.f32.xlu0 %v220
        %v222 = vpop.xlane.xlu0 %221
        %v223 = vadd.f32 %v202, %v203
        %224 = vadd.xlane.f32.xlu0 %v223
        %v225 = vpop.xlane.xlu0 %224
        %v226 = vadd.f32 %v204, %v205
        %227 = vadd.xlane.f32.xlu0 %v226
        %v228 = vpop.xlane.xlu0 %227
        %v229 = vadd.f32 %v206, %v207
        %230 = vadd.xlane.f32.xlu0 %v229
        %v231 = vpop.xlane.xlu0 %230
        %v232 = vmul.f32 %v210, 0.00390625
        %v233 = vmul.f32 %v213, 0.00390625
        %v234 = vmul.f32 %v216, 0.00390625
        %v235 = vmul.f32 %v219, 0.00390625
        %v236 = vmul.f32 %v222, 0.00390625
        %v237 = vmul.f32 %v225, 0.00390625
        %v238 = vmul.f32 %v228, 0.00390625
        %v239 = vmul.f32 %v231, 0.00390625
        %s240 = scalar_lea.vmem %s167, 128 [#allocation2]
        %v241 = vld [vmem:[%s240] sm:$0xff]
        %v242 = vld [vmem:[%s240 + $0x8] sm:$0xff]
        %v243 = vld [vmem:[%s240 + $0x10] sm:$0xff]
        %v244 = vld [vmem:[%s240 + $0x18] sm:$0xff]
        %v245 = vld [vmem:[%s240 + $0x20] sm:$0xff]
        %v246 = vld [vmem:[%s240 + $0x28] sm:$0xff]
        %v247 = vld [vmem:[%s240 + $0x30] sm:$0xff]
        %v248 = vld [vmem:[%s240 + $0x38] sm:$0xff]
        %v249 = vld [vmem:[%s240 + $0x40] sm:$0xff]
        %v250 = vld [vmem:[%s240 + $0x48] sm:$0xff]
        %v251 = vld [vmem:[%s240 + $0x50] sm:$0xff]
        %v252 = vld [vmem:[%s240 + $0x58] sm:$0xff]
        %v253 = vld [vmem:[%s240 + $0x60] sm:$0xff]
        %v254 = vld [vmem:[%s240 + $0x68] sm:$0xff]
        %v255 = vld [vmem:[%s240 + $0x70] sm:$0xff]
        %v256 = vld [vmem:[%s240 + $0x78] sm:$0xff]
        %v257 = vadd.f32 %v241, %v242
        %258 = vadd.xlane.f32.xlu0 %v257
        %v259 = vpop.xlane.xlu0 %258
        %v260 = vadd.f32 %v243, %v244
        %261 = vadd.xlane.f32.xlu0 %v260
        %v262 = vpop.xlane.xlu0 %261
        %v263 = vadd.f32 %v245, %v246
        %264 = vadd.xlane.f32.xlu0 %v263
        %v265 = vpop.xlane.xlu0 %264
        %v266 = vadd.f32 %v247, %v248
        %267 = vadd.xlane.f32.xlu0 %v266
        %v268 = vpop.xlane.xlu0 %267
        %v269 = vadd.f32 %v249, %v250
        %270 = vadd.xlane.f32.xlu0 %v269
        %v271 = vpop.xlane.xlu0 %270
        %v272 = vadd.f32 %v251, %v252
        %273 = vadd.xlane.f32.xlu0 %v272
        %v274 = vpop.xlane.xlu0 %273
        %v275 = vadd.f32 %v253, %v254
        %276 = vadd.xlane.f32.xlu0 %v275
        %v277 = vpop.xlane.xlu0 %276
        %v278 = vadd.f32 %v255, %v256
        %279 = vadd.xlane.f32.xlu0 %v278
        %v280 = vpop.xlane.xlu0 %279
        %v281 = vmul.f32 %v259, 0.00390625
        %v282 = vmul.f32 %v262, 0.00390625
        %v283 = vmul.f32 %v265, 0.00390625
        %v284 = vmul.f32 %v268, 0.00390625
        %v285 = vmul.f32 %v271, 0.00390625
        %v286 = vmul.f32 %v274, 0.00390625
        %v287 = vmul.f32 %v277, 0.00390625
        %v288 = vmul.f32 %v280, 0.00390625
        %vm289 = vcmask 7168
        %v290 = vsel %vm289, %v232, %v281
        %v291 = vsel %vm289, %v233, %v282
        %v292 = vsel %vm289, %v234, %v283
        %v293 = vsel %vm289, %v235, %v284
        %v294 = vsel %vm289, %v236, %v285
        %v295 = vsel %vm289, %v237, %v286
        %v296 = vsel %vm289, %v238, %v287
        %v297 = vsel %vm289, %v239, %v288
        %v298 = vld [vmem:[%s1] sm:$0xf]
        %vm299 = vcmask 523264
        %v301 = vsel %vm299, %v298, 0
        %303 = vmatprep.subr.mxu0 0.0
        %304 = vmatpush1.msra.mxu0 %v290
        %305 = vmatprep.subr.mxu0 0.0
        %306 = vmatpush1.msra.mxu0 %v291
        %307 = vmatprep.subr.mxu0 0.0
        %308 = vmatpush1.msra.mxu0 %v292
        %309 = vmatprep.subr.mxu0 0.0
        %310 = vmatpush1.msra.mxu0 %v293
        %311 = vmatprep.subr.mxu0 0.0
        %312 = vmatpush1.msra.mxu0 %v294
        %313 = vmatprep.subr.mxu0 0.0
        %314 = vmatpush1.msra.mxu0 %v295
        %315 = vmatprep.subr.mxu0 0.0
        %316 = vmatpush1.msra.mxu0 %v296
        %317 = vmatprep.subr.mxu0 0.0
        %318 = vmatpush1.msra.mxu0 %v297
        %319 = vmatprep.subr.mxu0 0.0
        %320 = vmatpush1.msra.mxu0 0.0
        %321 = vmatprep.subr.mxu0 0.0
        %322 = vmatpush1.msra.mxu0 0.0
        %323 = vmatprep.subr.mxu0 0.0
        %324 = vmatpush1.msra.mxu0 0.0
        %325 = vmatprep.subr.mxu0 0.0
        %326 = vmatpush1.msra.mxu0 0.0
        %327 = vmatprep.subr.mxu0 0.0
        %328 = vmatpush1.msra.mxu0 0.0
        %329 = vmatprep.subr.mxu0 0.0
        %330 = vmatpush1.msra.mxu0 0.0
        %331 = vmatprep.subr.mxu0 0.0
        %332 = vmatpush1.msra.mxu0 0.0
        %333 = vmatprep.subr.mxu0 0.0
        %334 = vmatpush1.msra.mxu0 0.0
        %335 = vmatprep.subr.mxu0 0.0
        %336 = vmatpush1.msra.mxu0 0.0
        %337 = vmatprep.subr.mxu0 0.0
        %338 = vmatpush1.msra.mxu0 0.0
        %339 = vmatprep.subr.mxu0 0.0
        %340 = vmatpush1.msra.mxu0 0.0
        %341 = vmatprep.subr.mxu0 0.0
        %342 = vmatpush1.msra.mxu0 0.0
        %343 = vmatprep.subr.mxu0 0.0
        %344 = vmatpush1.msra.mxu0 0.0
        %345 = vmatprep.subr.mxu0 0.0
        %346 = vmatpush1.msra.mxu0 0.0
        %347 = vmatprep.subr.mxu0 0.0
        %348 = vmatpush1.msra.mxu0 0.0
        %349 = vmatprep.subr.mxu0 0.0
        %350 = vmatpush1.msra.mxu0 0.0
        %351 = vmatprep.subr.mxu0 0.0
        %352 = vmatpush1.msra.mxu0 0.0
        %353 = vmatprep.subr.mxu0 0.0
        %354 = vmatpush1.msra.mxu0 0.0
        %355 = vmatprep.subr.mxu0 0.0
        %356 = vmatpush1.msra.mxu0 0.0
        %357 = vmatprep.subr.mxu0 0.0
        %358 = vmatpush1.msra.mxu0 0.0
        %359 = vmatprep.subr.mxu0 0.0
        %360 = vmatpush1.msra.mxu0 0.0
        %361 = vmatprep.subr.mxu0 0.0
        %362 = vmatpush1.msra.mxu0 0.0
        %363 = vmatprep.subr.mxu0 0.0
        %364 = vmatpush1.msra.mxu0 0.0
        %365 = vmatprep.subr.mxu0 0.0
        %366 = vmatpush1.msra.mxu0 0.0
        %367 = vmatprep.mubr.f32.mxu0 0.0
        %368 = vmatmul.mubr.f32.gmra.mrb[0].mxu0 %v301
        %v369 = vpop.f32.mrb[0].mxu0
        %v370 = vadd.f32 0.0, %v369
        %v371 = vpop.f32.mrb[0].mxu0
        %372 = vdwg.mxu0
        %v373 = vmax.f32 %v370, 0.0
        %v374 = vld [vmem:[%s2] sm:$0xff]
        %v375 = vld [vmem:[%s2 + $0x8] sm:$0xff]
        %v376 = vld [vmem:[%s2 + $0x10] sm:$0xff]
        %v377 = vld [vmem:[%s2 + $0x18] sm:$0xff]
        %v378 = vld [vmem:[%s2 + $0x20] sm:$0xff]
        %v379 = vld [vmem:[%s2 + $0x28] sm:$0xff]
        %v380 = vld [vmem:[%s2 + $0x30] sm:$0xff]
        %v381 = vld [vmem:[%s2 + $0x38] sm:$0xff]
        %vm382 = vcmask 31744
        %v384 = vsel %vm382, %v374, 0
        %v387 = vsel %vm382, %v375, 0
        %v390 = vsel %vm382, %v376, 0
        %v393 = vsel %vm382, %v377, 0
        %v396 = vsel %vm382, %v378, 0
        %v399 = vsel %vm382, %v379, 0
        %v402 = vsel %vm382, %v380, 0
        %v405 = vsel %vm382, %v381, 0
        %vm407 = vcmask 1043456
        %v409 = vsel %vm407, %v373, 0
        %411 = vmatprep.subr.mxu0 0.0
        %412 = vmatpush1.msra.mxu0 %v409
        %413 = vmatprep.subr.mxu0 0.0
        %414 = vmatpush1.msra.mxu0 0.0
        %415 = vmatprep.subr.mxu0 0.0
        %416 = vmatpush1.msra.mxu0 0.0
        %417 = vmatprep.subr.mxu0 0.0
        %418 = vmatpush1.msra.mxu0 0.0
        %419 = vmatprep.subr.mxu0 0.0
        %420 = vmatpush1.msra.mxu0 0.0
        %421 = vmatprep.subr.mxu0 0.0
        %422 = vmatpush1.msra.mxu0 0.0
        %423 = vmatprep.subr.mxu0 0.0
        %424 = vmatpush1.msra.mxu0 0.0
        %425 = vmatprep.subr.mxu0 0.0
        %426 = vmatpush1.msra.mxu0 0.0
        %427 = vmatprep.subr.mxu0 0.0
        %428 = vmatpush1.msra.mxu0 0.0
        %429 = vmatprep.subr.mxu0 0.0
        %430 = vmatpush1.msra.mxu0 0.0
        %431 = vmatprep.subr.mxu0 0.0
        %432 = vmatpush1.msra.mxu0 0.0
        %433 = vmatprep.subr.mxu0 0.0
        %434 = vmatpush1.msra.mxu0 0.0
        %435 = vmatprep.subr.mxu0 0.0
        %436 = vmatpush1.msra.mxu0 0.0
        %437 = vmatprep.subr.mxu0 0.0
        %438 = vmatpush1.msra.mxu0 0.0
        %439 = vmatprep.subr.mxu0 0.0
        %440 = vmatpush1.msra.mxu0 0.0
        %441 = vmatprep.subr.mxu0 0.0
        %442 = vmatpush1.msra.mxu0 0.0
        %443 = vmatprep.subr.mxu0 0.0
        %444 = vmatpush1.msra.mxu0 0.0
        %445 = vmatprep.subr.mxu0 0.0
        %446 = vmatpush1.msra.mxu0 0.0
        %447 = vmatprep.subr.mxu0 0.0
        %448 = vmatpush1.msra.mxu0 0.0
        %449 = vmatprep.subr.mxu0 0.0
        %450 = vmatpush1.msra.mxu0 0.0
        %451 = vmatprep.subr.mxu0 0.0
        %452 = vmatpush1.msra.mxu0 0.0
        %453 = vmatprep.subr.mxu0 0.0
        %454 = vmatpush1.msra.mxu0 0.0
        %455 = vmatprep.subr.mxu0 0.0
        %456 = vmatpush1.msra.mxu0 0.0
        %457 = vmatprep.subr.mxu0 0.0
        %458 = vmatpush1.msra.mxu0 0.0
        %459 = vmatprep.subr.mxu0 0.0
        %460 = vmatpush1.msra.mxu0 0.0
        %461 = vmatprep.subr.mxu0 0.0
        %462 = vmatpush1.msra.mxu0 0.0
        %463 = vmatprep.subr.mxu0 0.0
        %464 = vmatpush1.msra.mxu0 0.0
        %465 = vmatprep.subr.mxu0 0.0
        %466 = vmatpush1.msra.mxu0 0.0
        %467 = vmatprep.subr.mxu0 0.0
        %468 = vmatpush1.msra.mxu0 0.0
        %469 = vmatprep.subr.mxu0 0.0
        %470 = vmatpush1.msra.mxu0 0.0
        %471 = vmatprep.subr.mxu0 0.0
        %472 = vmatpush1.msra.mxu0 0.0
        %473 = vmatprep.subr.mxu0 0.0
        %474 = vmatpush1.msra.mxu0 0.0
        %475 = vmatprep.mubr.f32.mxu0 0.0
        %476 = vmatmul.mubr.f32.gmra.mrb[0].mxu0 %v384
        %v477 = vpop.f32.mrb[0].mxu0
        %v478 = vadd.f32 0.0, %v477
        %v479 = vpop.f32.mrb[0].mxu0
        %480 = vmatprep.mubr.f32.mxu0 0.0
        %481 = vmatmul.mubr.f32.gmra.mrb[0].mxu0 %v387
        %v482 = vpop.f32.mrb[0].mxu0
        %v483 = vadd.f32 0.0, %v482
        %v484 = vpop.f32.mrb[0].mxu0
        %485 = vmatprep.mubr.f32.mxu0 0.0
        %486 = vmatmul.mubr.f32.gmra.mrb[0].mxu0 %v390
        %v487 = vpop.f32.mrb[0].mxu0
        %v488 = vadd.f32 0.0, %v487
        %v489 = vpop.f32.mrb[0].mxu0
        %490 = vmatprep.mubr.f32.mxu0 0.0
        %491 = vmatmul.mubr.f32.gmra.mrb[0].mxu0 %v393
        %v492 = vpop.f32.mrb[0].mxu0
        %v493 = vadd.f32 0.0, %v492
        %v494 = vpop.f32.mrb[0].mxu0
        %495 = vmatprep.mubr.f32.mxu0 0.0
        %496 = vmatmul.mubr.f32.gmra.mrb[0].mxu0 %v396
        %v497 = vpop.f32.mrb[0].mxu0
        %v498 = vadd.f32 0.0, %v497
        %v499 = vpop.f32.mrb[0].mxu0
        %500 = vmatprep.mubr.f32.mxu0 0.0
        %501 = vmatmul.mubr.f32.gmra.mrb[0].mxu0 %v399
        %v502 = vpop.f32.mrb[0].mxu0
        %v503 = vadd.f32 0.0, %v502
        %v504 = vpop.f32.mrb[0].mxu0
        %505 = vmatprep.mubr.f32.mxu0 0.0
        %506 = vmatmul.mubr.f32.gmra.mrb[0].mxu0 %v402
        %v507 = vpop.f32.mrb[0].mxu0
        %v508 = vadd.f32 0.0, %v507
        %v509 = vpop.f32.mrb[0].mxu0
        %510 = vmatprep.mubr.f32.mxu0 0.0
        %511 = vmatmul.mubr.f32.gmra.mrb[0].mxu0 %v405
        %v512 = vpop.f32.mrb[0].mxu0
        %v513 = vadd.f32 0.0, %v512
        %v514 = vpop.f32.mrb[0].mxu0
        %515 = vdwg.mxu0
        %v516 = vsub.f32 0.0, %v478
        %v517 = vsub.f32 0.0, %v483
        %v518 = vsub.f32 0.0, %v488
        %v519 = vsub.f32 0.0, %v493
        %v520 = vsub.f32 0.0, %v498
        %v521 = vsub.f32 0.0, %v503
        %v522 = vsub.f32 0.0, %v508
        %v523 = vsub.f32 0.0, %v513
        %v524 = vmul.f32 %v516, 1.442695
        %v525 = vpow.pop %v524
        %v526 = vmul.f32 %v517, 1.442695
        %v527 = vpow.pop %v526
        %v528 = vmul.f32 %v518, 1.442695
        %v529 = vpow.pop %v528
        %v530 = vmul.f32 %v519, 1.442695
        %v531 = vpow.pop %v530
        %v532 = vmul.f32 %v520, 1.442695
        %v533 = vpow.pop %v532
        %v534 = vmul.f32 %v521, 1.442695
        %v535 = vpow.pop %v534
        %v536 = vmul.f32 %v522, 1.442695
        %v537 = vpow.pop %v536
        %v538 = vmul.f32 %v523, 1.442695
        %v539 = vpow.pop %v538
        %v540 = vadd.f32 %v525, 1.0
        %v541 = vadd.f32 %v527, 1.0
        %v542 = vadd.f32 %v529, 1.0
        %v543 = vadd.f32 %v531, 1.0
        %v544 = vadd.f32 %v533, 1.0
        %v545 = vadd.f32 %v535, 1.0
        %v546 = vadd.f32 %v537, 1.0
        %v547 = vadd.f32 %v539, 1.0
        %v548 = vrcp.pop %v540
        %v549 = vmul.f32 1.0, %v548
        %v550 = vrcp.pop %v541
        %v551 = vmul.f32 1.0, %v550
        %v552 = vrcp.pop %v542
        %v553 = vmul.f32 1.0, %v552
        %v554 = vrcp.pop %v543
        %v555 = vmul.f32 1.0, %v554
        %v556 = vrcp.pop %v544
        %v557 = vmul.f32 1.0, %v556
        %v558 = vrcp.pop %v545
        %v559 = vmul.f32 1.0, %v558
        %v560 = vrcp.pop %v546
        %v561 = vmul.f32 1.0, %v560
        %v562 = vrcp.pop %v547
        %v563 = vmul.f32 1.0, %v562
        %565 = vset.pattern.permute.xlu0 0
        %566 = vperm.xlu0 %565, %v549
        %v567 = vpop.permute.xlu0 %566
        %570 = vset.pattern.permute.xlu0 0
        %571 = vperm.xlu0 %570, %v551
        %v572 = vpop.permute.xlu0 %571
        %575 = vset.pattern.permute.xlu0 0
        %576 = vperm.xlu0 %575, %v553
        %v577 = vpop.permute.xlu0 %576
        %580 = vset.pattern.permute.xlu0 0
        %581 = vperm.xlu0 %580, %v555
        %v582 = vpop.permute.xlu0 %581
        %585 = vset.pattern.permute.xlu0 0
        %586 = vperm.xlu0 %585, %v557
        %v587 = vpop.permute.xlu0 %586
        %590 = vset.pattern.permute.xlu0 0
        %591 = vperm.xlu0 %590, %v559
        %v592 = vpop.permute.xlu0 %591
        %595 = vset.pattern.permute.xlu0 0
        %596 = vperm.xlu0 %595, %v561
        %v597 = vpop.permute.xlu0 %596
        %600 = vset.pattern.permute.xlu0 0
        %601 = vperm.xlu0 %600, %v563
        %v602 = vpop.permute.xlu0 %601
        %v604 = vmul.f32 %v192, %v567
        %v605 = vmul.f32 %v193, %v567
        %v606 = vmul.f32 %v194, %v572
        %v607 = vmul.f32 %v195, %v572
        %v608 = vmul.f32 %v196, %v577
        %v609 = vmul.f32 %v197, %v577
        %v610 = vmul.f32 %v198, %v582
        %v611 = vmul.f32 %v199, %v582
        %v612 = vmul.f32 %v200, %v587
        %v613 = vmul.f32 %v201, %v587
        %v614 = vmul.f32 %v202, %v592
        %v615 = vmul.f32 %v203, %v592
        %v616 = vmul.f32 %v204, %v597
        %v617 = vmul.f32 %v205, %v597
        %v618 = vmul.f32 %v206, %v602
        %v619 = vmul.f32 %v207, %v602
        %620 = vst [vmem:[%s189] sm:$0xff] %v604
        %621 = vst [vmem:[%s189 + $0x8] sm:$0xff] %v605
        %622 = vst [vmem:[%s189 + $0x10] sm:$0xff] %v606
        %623 = vst [vmem:[%s189 + $0x18] sm:$0xff] %v607
        %624 = vst [vmem:[%s189 + $0x20] sm:$0xff] %v608
        %625 = vst [vmem:[%s189 + $0x28] sm:$0xff] %v609
        %626 = vst [vmem:[%s189 + $0x30] sm:$0xff] %v610
        %627 = vst [vmem:[%s189 + $0x38] sm:$0xff] %v611
        %628 = vst [vmem:[%s189 + $0x40] sm:$0xff] %v612
        %629 = vst [vmem:[%s189 + $0x48] sm:$0xff] %v613
        %630 = vst [vmem:[%s189 + $0x50] sm:$0xff] %v614
        %631 = vst [vmem:[%s189 + $0x58] sm:$0xff] %v615
        %632 = vst [vmem:[%s189 + $0x60] sm:$0xff] %v616
        %633 = vst [vmem:[%s189 + $0x68] sm:$0xff] %v617
        %634 = vst [vmem:[%s189 + $0x70] sm:$0xff] %v618
        %635 = vst [vmem:[%s189 + $0x78] sm:$0xff] %v619
        %v636 = vld [vmem:[%s240] sm:$0xff]
        %v637 = vld [vmem:[%s240 + $0x8] sm:$0xff]
        %v638 = vld [vmem:[%s240 + $0x10] sm:$0xff]
        %v639 = vld [vmem:[%s240 + $0x18] sm:$0xff]
        %v640 = vld [vmem:[%s240 + $0x20] sm:$0xff]
        %v641 = vld [vmem:[%s240 + $0x28] sm:$0xff]
        %v642 = vld [vmem:[%s240 + $0x30] sm:$0xff]
        %v643 = vld [vmem:[%s240 + $0x38] sm:$0xff]
        %v644 = vld [vmem:[%s240 + $0x40] sm:$0xff]
        %v645 = vld [vmem:[%s240 + $0x48] sm:$0xff]
        %v646 = vld [vmem:[%s240 + $0x50] sm:$0xff]
        %v647 = vld [vmem:[%s240 + $0x58] sm:$0xff]
        %v648 = vld [vmem:[%s240 + $0x60] sm:$0xff]
        %v649 = vld [vmem:[%s240 + $0x68] sm:$0xff]
        %v650 = vld [vmem:[%s240 + $0x70] sm:$0xff]
        %v651 = vld [vmem:[%s240 + $0x78] sm:$0xff]
        %652 = vset.pattern.permute.xlu0 1
        %653 = vperm.xlu0 %652, %v549
        %v654 = vpop.permute.xlu0 %653
        %656 = vset.pattern.permute.xlu0 1
        %657 = vperm.xlu0 %656, %v551
        %v658 = vpop.permute.xlu0 %657
        %660 = vset.pattern.permute.xlu0 1
        %661 = vperm.xlu0 %660, %v553
        %v662 = vpop.permute.xlu0 %661
        %664 = vset.pattern.permute.xlu0 1
        %665 = vperm.xlu0 %664, %v555
        %v666 = vpop.permute.xlu0 %665
        %668 = vset.pattern.permute.xlu0 1
        %669 = vperm.xlu0 %668, %v557
        %v670 = vpop.permute.xlu0 %669
        %672 = vset.pattern.permute.xlu0 1
        %673 = vperm.xlu0 %672, %v559
        %v674 = vpop.permute.xlu0 %673
        %676 = vset.pattern.permute.xlu0 1
        %677 = vperm.xlu0 %676, %v561
        %v678 = vpop.permute.xlu0 %677
        %680 = vset.pattern.permute.xlu0 1
        %681 = vperm.xlu0 %680, %v563
        %v682 = vpop.permute.xlu0 %681
        %v684 = vmul.f32 %v636, %v654
        %v685 = vmul.f32 %v637, %v654
        %v686 = vmul.f32 %v638, %v658
        %v687 = vmul.f32 %v639, %v658
        %v688 = vmul.f32 %v640, %v662
        %v689 = vmul.f32 %v641, %v662
        %v690 = vmul.f32 %v642, %v666
        %v691 = vmul.f32 %v643, %v666
        %v692 = vmul.f32 %v644, %v670
        %v693 = vmul.f32 %v645, %v670
        %v694 = vmul.f32 %v646, %v674
        %v695 = vmul.f32 %v647, %v674
        %v696 = vmul.f32 %v648, %v678
        %v697 = vmul.f32 %v649, %v678
        %v698 = vmul.f32 %v650, %v682
        %v699 = vmul.f32 %v651, %v682
        %s700 = scalar_lea.vmem %s189, 128 [#allocation5]
        %701 = vst [vmem:[%s700] sm:$0xff] %v684
        %702 = vst [vmem:[%s700 + $0x8] sm:$0xff] %v685
        %703 = vst [vmem:[%s700 + $0x10] sm:$0xff] %v686
        %704 = vst [vmem:[%s700 + $0x18] sm:$0xff] %v687
        %705 = vst [vmem:[%s700 + $0x20] sm:$0xff] %v688
        %706 = vst [vmem:[%s700 + $0x28] sm:$0xff] %v689
        %707 = vst [vmem:[%s700 + $0x30] sm:$0xff] %v690
        %708 = vst [vmem:[%s700 + $0x38] sm:$0xff] %v691
        %709 = vst [vmem:[%s700 + $0x40] sm:$0xff] %v692
        %710 = vst [vmem:[%s700 + $0x48] sm:$0xff] %v693
        %711 = vst [vmem:[%s700 + $0x50] sm:$0xff] %v694
        %712 = vst [vmem:[%s700 + $0x58] sm:$0xff] %v695
        %713 = vst [vmem:[%s700 + $0x60] sm:$0xff] %v696
        %714 = vst [vmem:[%s700 + $0x68] sm:$0xff] %v697
        %715 = vst [vmem:[%s700 + $0x70] sm:$0xff] %v698
        %716 = vst [vmem:[%s700 + $0x78] sm:$0xff] %v699
        %s717 = sand.u32 %s96, 1
        %s718 = scalar_lea.sflag [#allocation4], %s717
        %s719 = sand.u32 %s96, 1
        %s720 = smul.addr %s719, 256
        %s721 = scalar_lea.vmem [#allocation5], %s720
        // Predicated region
        $region37: #{tpu_custom_call.1} parent=31 // pred_check
          %p722 = pneg %p106
        $region38: #{tpu_custom_call.1} parent=31 // pred_check_branch
          %724 = sbr.rel (%p722) target = $region40
        $region39: #{tpu_custom_call.1} parent=31 // pred_region
          %s725 = smul.u32 2, %s20
          %s727 = ssub.s32 4096, 4096
          %728 = vsyncadd %s718, %s727
          %s729 = smul.addr %s725, 16
          %s730 = smul.addr %s729, 128
          %s731 = scalar_lea.hbm %s3, %s730
          %s732 = sshll.u32 %s721, 4
          %s733 = int_to_ptr.vmem [resolvable:$true] %s732
          %738 = dma.vmem_to_hbm [thread:$0]  %s733, 4096, %s731, %s718, 256, 256, 16
        $region40: #{tpu_custom_call.1} parent=31 // pred_fallthru
          _
      $region32: #{tpu_custom_call.1} parent=5 // pred_fallthru
        _
      %p739 = scmp.le.s32.totalorder 2, %s15
      // Predicated region
      $region41: #{tpu_custom_call.1} parent=5 // pred_check
        %p740 = pneg %p739
      $region42: #{tpu_custom_call.1} parent=5 // pred_check_branch
        %742 = sbr.rel (%p740) target = $region44
      $region43: #{tpu_custom_call.1} parent=5 // pred_region
        %s743 = ssub.s32 %s15, 2
        // Predicated region
        $region45: #{tpu_custom_call.1} parent=43 // pred_check
          %p744 = pneg %p112
        $region46: #{tpu_custom_call.1} parent=43 // pred_check_branch
          %746 = sbr.rel (%p744) target = $region48
        $region47: #{tpu_custom_call.1} parent=43 // pred_region
          %s747 = sand.u32 %s97, 1
          %s748 = scalar_lea.sflag [#allocation4], %s747
          %s749 = sand.u32 %s97, 1
          %s750 = smul.addr %s749, 256
          %s751 = scalar_lea.vmem [#allocation5], %s750
          %752 = dma.done %s748, 4096
        $region48: #{tpu_custom_call.1} parent=43 // pred_fallthru
          _
      $region44: #{tpu_custom_call.1} parent=5 // pred_fallthru
        _
    $region6: #{tpu_custom_call.1} parent=1 // loop_footer
      %s19 = sadd.s32 1, %s15
    $region7: #{tpu_custom_call.1} parent=1 // loop_footer_branch
      %14 = sbr.rel target = $region3
    $region8: #{tpu_custom_call.1} parent=1 // loop_exit
      _
    %753 = vsyncpa [#allocation3], 1
    %s754 = scalar_lea.sflag [#allocation3], 1
    %755 = vsyncpa %s754, 1
    %756 = vsyncpa [#allocation4], 1
    %s757 = scalar_lea.sflag [#allocation4], 1
    %758 = vsyncpa %s757, 1

</llo_original>
